<compile_context>
chip_gen: v5e
topology: v5e:2x2
jax: 0.10.0
libtpu: 0.0.40
codegen_flags: <defaults>
</compile_context>

<pallas_src>
import functools

import jax
import jax.numpy as jnp
from jax.experimental import pallas as pl
from jax.experimental.pallas import tpu as pltpu

_LANE = 128  # lane width; all feature dims are padded to a multiple of this


def _round_up(n, m):
    return ((n + m - 1) // m) * m


def _mlp_kernel(x_ref, w_ref, b_ref, o_ref, *, num_layers: int):
    """Fused MLP forward (everything VMEM-resident, fully unrolled).

      x_ref : [B, PAD]          padded input activations
      w_ref : [L, PAD, PAD]     packed, pre-transposed, zero-padded weights
      b_ref : [L, B, PAD]       packed, batch-broadcast, zero-padded biases
      o_ref : [B, PAD]          lane-dense output slab (real result in col 0)
    """
    h = x_ref[...]
    for i in range(num_layers):  # static unroll at trace time
        # Static slab indices -> free ref views, single [PAD,PAD] / [B,PAD] loads.
        h = jnp.dot(h, w_ref[i], preferred_element_type=jnp.float32) + b_ref[i]
        if i < num_layers - 1:
            h = jnp.maximum(h, 0.0)  # ReLU between hidden layers
    o_ref[...] = h.astype(o_ref.dtype)


@functools.partial(jax.jit, static_argnames=("num_layers",))
def _fused_mlp(x, w_slab, b_slab, *, num_layers):
    """x: [B, F0] f32 -> [B] f32 (flattened final 1-wide layer)."""
    B, F0 = x.shape
    pad = w_slab.shape[-1]
    # Lane-pad the input once so every layer is a uniform [B,PAD]@[PAD,PAD].
    x_pad = jnp.pad(x.astype(jnp.float32), ((0, 0), (0, pad - F0)))

    kernel = functools.partial(_mlp_kernel, num_layers=num_layers)
    out = pl.pallas_call(
        kernel,
        out_shape=jax.ShapeDtypeStruct((B, pad), jnp.float32),
        in_specs=[pl.BlockSpec(memory_space=pltpu.MemorySpace.VMEM)] * 3,
        out_specs=pl.BlockSpec(memory_space=pltpu.MemorySpace.VMEM),
    )(x_pad, w_slab, b_slab)
    # Column 0 of the lane-dense slab == flatten() of the [B, 1] result
    # (padded weight columns / bias entries are 0, so cols 1..PAD-1 are 0).
    return out[:, 0]
    # TODO(synk): if batch grows, add a leading batch grid axis (TB>=512 rows,
    # dimension_semantics=("parallel",) for v7x's 2 TCs), keep the slab
    # BlockSpecs' index_map constant so params stay VMEM-resident, and size
    # TB against v7x's 64 MiB VMEM via pltpu.CompilerParams(vmem_limit_bytes=...).


def init_params(key, n_features, layers):
    """Deterministic PyTorch-style Linear init: U(-1/sqrt(fan_in), +1/sqrt(fan_in)).

    Returns torch-layout params: list of (w [out, in], b [out]).
    """
    layers_in = [n_features] + list(layers)
    layers_out = list(layers) + [1]
    params = []
    for fin, fout in zip(layers_in, layers_out):
        key, kw, kb = jax.random.split(key, 3)
        bound = 1.0 / jnp.sqrt(jnp.float32(fin))
        w = jax.random.uniform(kw, (fout, fin), jnp.float32, -bound, bound)
        b = jax.random.uniform(kb, (fout,), jnp.float32, -bound, bound)
        params.append((w, b))
    return params


def prepare_params(params, batch):
    """One-time transform of torch-layout params into two packed VMEM slabs.

    w_slab[i, :fin, :fout] = W_i^T  (rest zero)        -> [L, PAD, PAD]
    b_slab[i, :,   :fout] = b_i broadcast over batch   -> [L, B,  PAD]

    Zero padding + zero bias pads keep padded columns exactly 0 through every
    layer (ReLU(0) = 0), so no masking is needed anywhere.
    """
    num_layers = len(params)
    max_dim = max([p[0].shape[1] for p in params] + [p[0].shape[0] for p in params])
    pad = _round_up(max(max_dim, _LANE), _LANE)

    w_slab = jnp.zeros((num_layers, pad, pad), jnp.float32)
    b_slab = jnp.zeros((num_layers, batch, pad), jnp.float32)
    for i, (w, b) in enumerate(params):
        fout, fin = w.shape
        w_slab = w_slab.at[i, :fin, :fout].set(jnp.asarray(w, jnp.float32).T)
        b_slab = b_slab.at[i, :, :fout].set(
            jnp.broadcast_to(jnp.asarray(b, jnp.float32), (batch, fout)))
    return w_slab, b_slab


def net_forward(w_slab, b_slab, xb, num_layers):
    """Pallas equivalent of Net.forward. xb: [B, n_features] -> [B]."""
    return _fused_mlp(xb, w_slab, b_slab, num_layers=num_layers)


def net_forward_ref(params, xb):
    """Plain-JAX reference (torch-layout params) for correctness check."""
    n = len(params)
    for i, (w, b) in enumerate(params):
        xb = xb @ w.T + b
        if i < n - 1:
            xb = jnp.maximum(xb, 0.0)
    return xb.reshape(-1)  # torch .flatten()


if __name__ == "__main__":
    key = jax.random.PRNGKey(0)
    batch = 8
    n_features = 32
    hidden_layers = [64, 32]

    key, kx = jax.random.split(key)
    x = jax.random.normal(kx, (batch, n_features), jnp.float32)

    params = init_params(key, n_features, hidden_layers)       # torch layout
    w_slab, b_slab = prepare_params(params, batch)              # packed slabs (once)
    num_layers = len(params)

    out = net_forward(w_slab, b_slab, x, num_layers)
    out = jax.block_until_ready(out)

    ref = net_forward_ref(params, x)
    assert out.shape == (batch,), out.shape
    assert jnp.allclose(out, ref, atol=1e-5, rtol=1e-5), (out, ref)

    print("KERNEL_OK")
</pallas_src>

<mosaic_0001>
module attributes {stable_mosaic.version = 11 : i64} {
  func.func @_mlp_kernel(%arg0: memref<8x128xf32, #tpu.memory_space<vmem>>, %arg1: memref<3x128x128xf32, #tpu.memory_space<vmem>>, %arg2: memref<3x8x128xf32, #tpu.memory_space<vmem>>, %arg3: memref<8x128xf32, #tpu.memory_space<vmem>>) attributes {dimension_semantics = [], scalar_prefetch = 0 : i64, scratch_operands = 0 : i64, tpu.core_type = #tpu.core_type<tc>} {
    %c0 = arith.constant 0 : index
    %c0_0 = arith.constant 0 : index
    %0 = vector.load %arg0[%c0, %c0_0] : memref<8x128xf32, #tpu.memory_space<vmem>>, vector<8x128xf32>
    %c0_1 = arith.constant 0 : index
    %c0_2 = arith.constant 0 : index
    %c0_3 = arith.constant 0 : index
    %1 = vector.load %arg1[%c0_1, %c0_2, %c0_3] : memref<3x128x128xf32, #tpu.memory_space<vmem>>, vector<1x128x128xf32>
    %2 = vector.shape_cast %1 : vector<1x128x128xf32> to vector<128x128xf32>
    %cst = arith.constant dense<0.000000e+00> : vector<8x128xf32>
    %3 = tpu.matmul %0, %2, %cst {dimension_numbers = #tpu.dot_dimension_numbers<[1], [0], [0], [1], [0, 0, 1, 1], [], []>} : vector<8x128xf32>, vector<128x128xf32>, vector<8x128xf32> -> vector<8x128xf32>
    %c0_4 = arith.constant 0 : index
    %c0_5 = arith.constant 0 : index
    %c0_6 = arith.constant 0 : index
    %4 = vector.load %arg2[%c0_4, %c0_5, %c0_6] : memref<3x8x128xf32, #tpu.memory_space<vmem>>, vector<1x8x128xf32>
    %5 = vector.shape_cast %4 : vector<1x8x128xf32> to vector<8x128xf32>
    %6 = arith.addf %3, %5 : vector<8x128xf32>
    %cst_7 = arith.constant 0.000000e+00 : f32
    %7 = vector.broadcast %cst_7 : f32 to vector<8x128xf32>
    %8 = arith.maximumf %6, %7 : vector<8x128xf32>
    %c1 = arith.constant 1 : index
    %c0_8 = arith.constant 0 : index
    %c0_9 = arith.constant 0 : index
    %9 = vector.load %arg1[%c1, %c0_8, %c0_9] : memref<3x128x128xf32, #tpu.memory_space<vmem>>, vector<1x128x128xf32>
    %10 = vector.shape_cast %9 : vector<1x128x128xf32> to vector<128x128xf32>
    %cst_10 = arith.constant dense<0.000000e+00> : vector<8x128xf32>
    %11 = tpu.matmul %8, %10, %cst_10 {dimension_numbers = #tpu.dot_dimension_numbers<[1], [0], [0], [1], [0, 0, 1, 1], [], []>} : vector<8x128xf32>, vector<128x128xf32>, vector<8x128xf32> -> vector<8x128xf32>
    %c1_11 = arith.constant 1 : index
    %c0_12 = arith.constant 0 : index
    %c0_13 = arith.constant 0 : index
    %12 = vector.load %arg2[%c1_11, %c0_12, %c0_13] : memref<3x8x128xf32, #tpu.memory_space<vmem>>, vector<1x8x128xf32>
    %13 = vector.shape_cast %12 : vector<1x8x128xf32> to vector<8x128xf32>
    %14 = arith.addf %11, %13 : vector<8x128xf32>
    %cst_14 = arith.constant 0.000000e+00 : f32
    %15 = vector.broadcast %cst_14 : f32 to vector<8x128xf32>
    %16 = arith.maximumf %14, %15 : vector<8x128xf32>
    %c2 = arith.constant 2 : index
    %c0_15 = arith.constant 0 : index
    %c0_16 = arith.constant 0 : index
    %17 = vector.load %arg1[%c2, %c0_15, %c0_16] : memref<3x128x128xf32, #tpu.memory_space<vmem>>, vector<1x128x128xf32>
    %18 = vector.shape_cast %17 : vector<1x128x128xf32> to vector<128x128xf32>
    %cst_17 = arith.constant dense<0.000000e+00> : vector<8x128xf32>
    %19 = tpu.matmul %16, %18, %cst_17 {dimension_numbers = #tpu.dot_dimension_numbers<[1], [0], [0], [1], [0, 0, 1, 1], [], []>} : vector<8x128xf32>, vector<128x128xf32>, vector<8x128xf32> -> vector<8x128xf32>
    %c2_18 = arith.constant 2 : index
    %c0_19 = arith.constant 0 : index
    %c0_20 = arith.constant 0 : index
    %20 = vector.load %arg2[%c2_18, %c0_19, %c0_20] : memref<3x8x128xf32, #tpu.memory_space<vmem>>, vector<1x8x128xf32>
    %21 = vector.shape_cast %20 : vector<1x8x128xf32> to vector<8x128xf32>
    %22 = arith.addf %19, %21 : vector<8x128xf32>
    %c0_21 = arith.constant 0 : index
    %c0_22 = arith.constant 0 : index
    %23 = vector.load %arg3[%c0_21, %c0_22] : memref<8x128xf32, #tpu.memory_space<vmem>>, vector<8x128xf32>
    tpu.vector_store %arg3[%c0_21, %c0_22], %22 {strides = array<i32>} : memref<8x128xf32, #tpu.memory_space<vmem>>, vector<8x128xf32>,
    return
  }
}

</mosaic_0001>

<llo_original>
// kernel: _fused_mlp.1
$region0: #{_fused_mlp.1}
  #allocation0 [shape = 'u32[]', space=smem, size = 0x4, offset = 0x4, fixed_abs, tag = 'smem constant byte address 0x4 - core index']
  #allocation1 [shape = 'u32[72,128]{1,0:T(1,128)}', space=vmem, size = 0x9000, scoped, tag = 'internal scratch']
  %s0 = inlined_call_operand.vmem [shape: f32[8,128], index: 0, kind: input, shape index: {}]
  %s1 = inlined_call_operand.hbm [shape: f32[3,128,128], index: 1, kind: input, shape index: {}]
  %s2 = inlined_call_operand.hbm [shape: f32[3,8,128], index: 2, kind: input, shape index: {}]
  %s3 = inlined_call_operand.vmem [shape: f32[8,128], index: 3, kind: output, shape index: {}]
  %s4 = sld [smem:[#allocation0]]
  $region30: #{_fused_mlp.1} parent=0
    _
  %s6 = ssub.s32 1, %s4
  %s7 = scalar_select 0, %s6, %s4
  $region1: #{_fused_mlp.1} parent=0
    #allocation2 [shape = 'u8[196608]{0}', space=vmem, size = 0x30000, scoped, tag = 'input window, operand 1, single buffered']
    #allocation3 [shape = 's32[1]{0}', space=sflag, size = 0x4, scoped, tag = 'scoped memory for _fused_mlp.1']
    #allocation4 [shape = 'u8[12288]{0}', space=vmem, size = 0x3000, scoped, tag = 'input window, operand 2, single buffered']
    #allocation5 [shape = 's32[1]{0}', space=sflag, size = 0x4, scoped, tag = 'scoped memory for _fused_mlp.1']
    %8 = vsyncpa [#allocation3], 0
    %9 = vsyncpa [#allocation5], 0
    // Predicated region
    $region2: #{_fused_mlp.1} parent=1 // pred_check
      _
    $region3: #{_fused_mlp.1} parent=1 // pred_check_branch
      %11 = sbr.rel (0) target = $region5
    $region4: #{_fused_mlp.1} parent=1 // pred_region
      _
    $region5: #{_fused_mlp.1} parent=1 // pred_fallthru
      _
    // Predicated region
    $region6: #{_fused_mlp.1} parent=1 // pred_check
      _
    $region7: #{_fused_mlp.1} parent=1 // pred_check_branch
      %13 = sbr.rel (0) target = $region9
    $region8: #{_fused_mlp.1} parent=1 // pred_region
      %15 = vsyncadd [#allocation3], 0
      %s16 = sshll.u32 %s1, 4
      %s17 = int_to_ptr.hbm [resolvable:$true] %s16
      %s18 = sshll.u32 [#allocation2], 4
      %s19 = int_to_ptr.vmem [resolvable:$true] %s18
      %24 = dma.hbm_to_vmem [thread:$0]  %s17, 6144, %s19, [#allocation3], 128, 128, 8
    $region9: #{_fused_mlp.1} parent=1 // pred_fallthru
      _
    // Predicated region
    $region10: #{_fused_mlp.1} parent=1 // pred_check
      _
    $region11: #{_fused_mlp.1} parent=1 // pred_check_branch
      %26 = sbr.rel (0) target = $region13
    $region12: #{_fused_mlp.1} parent=1 // pred_region
      %28 = vsyncadd [#allocation5], 0
      %s29 = sshll.u32 %s2, 4
      %s30 = int_to_ptr.hbm [resolvable:$true] %s29
      %s31 = sshll.u32 [#allocation4], 4
      %s32 = int_to_ptr.vmem [resolvable:$true] %s31
      %37 = dma.hbm_to_vmem [thread:$0]  %s30, 384, %s32, [#allocation5], 128, 128, 8
    $region13: #{_fused_mlp.1} parent=1 // pred_fallthru
      _
    // Predicated region
    $region14: #{_fused_mlp.1} parent=1 // pred_check
      _
    $region15: #{_fused_mlp.1} parent=1 // pred_check_branch
      %39 = sbr.rel (0) target = $region17
    $region16: #{_fused_mlp.1} parent=1 // pred_region
      %41 = dma.done [#allocation3], 6144
    $region17: #{_fused_mlp.1} parent=1 // pred_fallthru
      _
    // Predicated region
    $region18: #{_fused_mlp.1} parent=1 // pred_check
      _
    $region19: #{_fused_mlp.1} parent=1 // pred_check_branch
      %43 = sbr.rel (0) target = $region21
    $region20: #{_fused_mlp.1} parent=1 // pred_region
      %45 = dma.done [#allocation5], 384
    $region21: #{_fused_mlp.1} parent=1 // pred_fallthru
      _
    %v46 = vld [vmem:[%s0] sm:$0xff]
    %v47 = vld [vmem:[#allocation2] sm:$0xff]
    %v48 = vld [vmem:[#allocation2 + $0x8] sm:$0xff]
    %v49 = vld [vmem:[#allocation2 + $0x10] sm:$0xff]
    %v50 = vld [vmem:[#allocation2 + $0x18] sm:$0xff]
    %v51 = vld [vmem:[#allocation2 + $0x20] sm:$0xff]
    %v52 = vld [vmem:[#allocation2 + $0x28] sm:$0xff]
    %v53 = vld [vmem:[#allocation2 + $0x30] sm:$0xff]
    %v54 = vld [vmem:[#allocation2 + $0x38] sm:$0xff]
    %v55 = vld [vmem:[#allocation2 + $0x40] sm:$0xff]
    %v56 = vld [vmem:[#allocation2 + $0x48] sm:$0xff]
    %v57 = vld [vmem:[#allocation2 + $0x50] sm:$0xff]
    %v58 = vld [vmem:[#allocation2 + $0x58] sm:$0xff]
    %v59 = vld [vmem:[#allocation2 + $0x60] sm:$0xff]
    %v60 = vld [vmem:[#allocation2 + $0x68] sm:$0xff]
    %v61 = vld [vmem:[#allocation2 + $0x70] sm:$0xff]
    %v62 = vld [vmem:[#allocation2 + $0x78] sm:$0xff]
    %v63 = vld [vmem:[#allocation4] sm:$0xff]
    %64 = vmatpush.msra.mxu0 %v62
    %65 = vmatpush.msra.mxu0 %v61
    %66 = vmatpush.msra.mxu0 %v60
    %67 = vmatpush.msra.mxu0 %v59
    %68 = vmatpush.msra.mxu0 %v58
    %69 = vmatpush.msra.mxu0 %v57
    %70 = vmatpush.msra.mxu0 %v56
    %71 = vmatpush.msra.mxu0 %v55
    %72 = vmatpush.msra.mxu0 %v54
    %73 = vmatpush.msra.mxu0 %v53
    %74 = vmatpush.msra.mxu0 %v52
    %75 = vmatpush.msra.mxu0 %v51
    %76 = vmatpush.msra.mxu0 %v50
    %77 = vmatpush.msra.mxu0 %v49
    %78 = vmatpush.msra.mxu0 %v48
    %79 = vmatpush.msra.mxu0 %v47
    %80 = vmatmul.f32.gmra.mxu0 %v46
    %v81 = vpop.f32.mrf.mxu0
    %v82 = vadd.f32 %v63, %v81
    %83 = vdwg.mxu0
    %v84 = vmax.f32 %v82, 0.0
    %s85 = scalar_lea.vmem [#allocation2], 128
    %v86 = vld [vmem:[%s85] sm:$0xff]
    %v87 = vld [vmem:[%s85 + $0x8] sm:$0xff]
    %v88 = vld [vmem:[%s85 + $0x10] sm:$0xff]
    %v89 = vld [vmem:[%s85 + $0x18] sm:$0xff]
    %v90 = vld [vmem:[%s85 + $0x20] sm:$0xff]
    %v91 = vld [vmem:[%s85 + $0x28] sm:$0xff]
    %v92 = vld [vmem:[%s85 + $0x30] sm:$0xff]
    %v93 = vld [vmem:[%s85 + $0x38] sm:$0xff]
    %v94 = vld [vmem:[%s85 + $0x40] sm:$0xff]
    %v95 = vld [vmem:[%s85 + $0x48] sm:$0xff]
    %v96 = vld [vmem:[%s85 + $0x50] sm:$0xff]
    %v97 = vld [vmem:[%s85 + $0x58] sm:$0xff]
    %v98 = vld [vmem:[%s85 + $0x60] sm:$0xff]
    %v99 = vld [vmem:[%s85 + $0x68] sm:$0xff]
    %v100 = vld [vmem:[%s85 + $0x70] sm:$0xff]
    %v101 = vld [vmem:[%s85 + $0x78] sm:$0xff]
    %s102 = scalar_lea.vmem [#allocation4], 8
    %v103 = vld [vmem:[%s102] sm:$0xff]
    %104 = vmatpush.msra.mxu0 %v101
    %105 = vmatpush.msra.mxu0 %v100
    %106 = vmatpush.msra.mxu0 %v99
    %107 = vmatpush.msra.mxu0 %v98
    %108 = vmatpush.msra.mxu0 %v97
    %109 = vmatpush.msra.mxu0 %v96
    %110 = vmatpush.msra.mxu0 %v95
    %111 = vmatpush.msra.mxu0 %v94
    %112 = vmatpush.msra.mxu0 %v93
    %113 = vmatpush.msra.mxu0 %v92
    %114 = vmatpush.msra.mxu0 %v91
    %115 = vmatpush.msra.mxu0 %v90
    %116 = vmatpush.msra.mxu0 %v89
    %117 = vmatpush.msra.mxu0 %v88
    %118 = vmatpush.msra.mxu0 %v87
    %119 = vmatpush.msra.mxu0 %v86
    %120 = vmatmul.f32.gmra.mxu0 %v84
    %v121 = vpop.f32.mrf.mxu0
    %v122 = vadd.f32 %v103, %v121
    %123 = vdwg.mxu0
    %v124 = vmax.f32 %v122, 0.0
    %s125 = scalar_lea.vmem [#allocation2], 256
    %v126 = vld [vmem:[%s125] sm:$0xff]
    %v127 = vld [vmem:[%s125 + $0x8] sm:$0xff]
    %v128 = vld [vmem:[%s125 + $0x10] sm:$0xff]
    %v129 = vld [vmem:[%s125 + $0x18] sm:$0xff]
    %v130 = vld [vmem:[%s125 + $0x20] sm:$0xff]
    %v131 = vld [vmem:[%s125 + $0x28] sm:$0xff]
    %v132 = vld [vmem:[%s125 + $0x30] sm:$0xff]
    %v133 = vld [vmem:[%s125 + $0x38] sm:$0xff]
    %v134 = vld [vmem:[%s125 + $0x40] sm:$0xff]
    %v135 = vld [vmem:[%s125 + $0x48] sm:$0xff]
    %v136 = vld [vmem:[%s125 + $0x50] sm:$0xff]
    %v137 = vld [vmem:[%s125 + $0x58] sm:$0xff]
    %v138 = vld [vmem:[%s125 + $0x60] sm:$0xff]
    %v139 = vld [vmem:[%s125 + $0x68] sm:$0xff]
    %v140 = vld [vmem:[%s125 + $0x70] sm:$0xff]
    %v141 = vld [vmem:[%s125 + $0x78] sm:$0xff]
    %s142 = scalar_lea.vmem [#allocation4], 16
    %v143 = vld [vmem:[%s142] sm:$0xff]
    %144 = vmatpush.msra.mxu0 %v141
    %145 = vmatpush.msra.mxu0 %v140
    %146 = vmatpush.msra.mxu0 %v139
    %147 = vmatpush.msra.mxu0 %v138
    %148 = vmatpush.msra.mxu0 %v137
    %149 = vmatpush.msra.mxu0 %v136
    %150 = vmatpush.msra.mxu0 %v135
    %151 = vmatpush.msra.mxu0 %v134
    %152 = vmatpush.msra.mxu0 %v133
    %153 = vmatpush.msra.mxu0 %v132
    %154 = vmatpush.msra.mxu0 %v131
    %155 = vmatpush.msra.mxu0 %v130
    %156 = vmatpush.msra.mxu0 %v129
    %157 = vmatpush.msra.mxu0 %v128
    %158 = vmatpush.msra.mxu0 %v127
    %159 = vmatpush.msra.mxu0 %v126
    %160 = vmatmul.f32.gmra.mxu0 %v124
    %v161 = vpop.f32.mrf.mxu0
    %v162 = vadd.f32 %v143, %v161
    %163 = vdwg.mxu0
    %164 = vst [vmem:[%s3] sm:$0xff] %v162
    // Predicated region
    $region22: #{_fused_mlp.1} parent=1 // pred_check
      _
    $region23: #{_fused_mlp.1} parent=1 // pred_check_branch
      %166 = sbr.rel (0) target = $region25
    $region24: #{_fused_mlp.1} parent=1 // pred_region
      _
    $region25: #{_fused_mlp.1} parent=1 // pred_fallthru
      _
    // Predicated region
    $region26: #{_fused_mlp.1} parent=1 // pred_check
      _
    $region27: #{_fused_mlp.1} parent=1 // pred_check_branch
      %168 = sbr.rel (0) target = $region29
    $region28: #{_fused_mlp.1} parent=1 // pred_region
      _
    $region29: #{_fused_mlp.1} parent=1 // pred_fallthru
      _
    %169 = vsyncpa [#allocation3], 1
    %170 = vsyncpa [#allocation5], 1

</llo_original>
